<compile_context>
chip_gen: v5e
topology: v5e:2x2
jax: 0.10.0
libtpu: 0.0.40
codegen_flags: <defaults>
</compile_context>

<pallas_src>
import jax
import jax.numpy as jnp
from jax.experimental import pallas as pl
from jax.experimental.pallas import tpu as pltpu  # noqa: F401  (kept per template; not needed)

# Problem sizes (small, consistent with the module defaults)
N, CIN, COUT = 2, 4, 8
H, W = 16, 16
KH, KW = 1, 9                # kernel_size=(1, 9)
WOUT = W - KW + 1            # padding defaults to 0 in the reference module -> 8
HWOUT = H * WOUT             # 128 -> exactly one vreg lane width
NC = N * CIN                 # 8  -> one full sublane group for the stacked input
NO = N * COUT                # 16 -> two sublane groups for the stacked output
EPS = 1e-5                   # BatchNorm2d default eps

# Packed parameter-slab column layout (one (NO, PCOLS) f32 array -> single DMA)
PW_COLS = NC                 # cols [0, NC)       : block-diagonal pointwise weight (NO, NC)
DW_COL = NC                  # cols [NC, NC+KW)   : depthwise taps, rows [0, NC)
GAMMA_COL = NC + KW          # col                : BN gamma, rows [0, COUT)
BETA_COL = NC + KW + 1       # col                : BN beta,  rows [0, COUT)
PCOLS = NC + KW + 2          # 19

# The lane-slice depthwise trick and unmasked 128-lane stores rely on these exact sizes.
assert HWOUT == 128 and NC == 8 and NO == 16 and N == 2


def fused_sepconv_bn_relu_kernel(x_ref, p_ref, o_ref):
    # x_ref: (NC, W*H)   = (8, 256)  input, batch stacked into sublanes, lane q = w*H + h
    # p_ref: (NO, PCOLS) = (16, 19)  packed params (block-diag pointwise, dw taps, gamma, beta)
    # o_ref: (NO, HWOUT) = (16, 128) output, lane q = w*H + h
    x = x_ref[...]                                           # (8, 256)
    wdw = p_ref[0:NC, DW_COL:DW_COL + KW]                    # (8, 9) depthwise taps (tiled over N)

    # Depthwise (1, KW) conv along W: output lane q = w*H + h reads input lane q + k*H,
    # so every tap is a 128-wide LANE slice over one full (8, 128) vreg (no batch loop).
    dw = x[:, 0:HWOUT] * wdw[:, 0:1]
    for k in range(1, KW):
        dw = dw + x[:, k * H:k * H + HWOUT] * wdw[:, k:k + 1]

    # Pointwise 1x1 conv for BOTH batch elements as ONE block-diagonal MXU matmul.
    wpw_bd = p_ref[:, 0:PW_COLS]                             # (16, 8)
    out = jnp.dot(wpw_bd, dw, preferred_element_type=jnp.float32)   # (16, 128)
    # Conv biases (per-output-channel constants) cancel exactly under training-mode BN: dropped.

    # BatchNorm batch statistics: one cross-lane reduce + a sublane fold over the batch halves.
    s1r = out.sum(axis=1, keepdims=True)                     # (16, 1)
    s2r = (out * out).sum(axis=1, keepdims=True)             # (16, 1)
    s1 = s1r[0:COUT] + s1r[COUT:NO]                          # (8, 1) per output channel
    s2 = s2r[0:COUT] + s2r[COUT:NO]
    inv_count = 1.0 / (N * HWOUT)
    mean = s1 * inv_count
    var = s2 * inv_count - mean * mean                       # biased (training-mode) variance
    gamma = p_ref[0:COUT, GAMMA_COL:GAMMA_COL + 1]           # (8, 1)
    beta = p_ref[0:COUT, BETA_COL:BETA_COL + 1]              # (8, 1)
    scale = gamma * jax.lax.rsqrt(var + EPS)                 # EUP rsqrt
    shift = beta - mean * scale
    scale2 = jnp.concatenate([scale, scale], axis=0)         # (16, 1) replicate over batch halves
    shift2 = jnp.concatenate([shift, shift], axis=0)

    # BN + ReLU, single full-width unmasked store.
    o_ref[...] = jnp.maximum(out * scale2 + shift2, 0.0)


@jax.jit
def separable_conv2d(x_nchw, wdw_t, bdw, wpw_t, bpw, gamma, beta):
    """x_nchw: (N, CIN, H, W). PyTorch-shaped params: wdw_t (CIN,1,KH,KW), bdw (CIN,),
       wpw_t (COUT,CIN,1,1), bpw (COUT,), gamma/beta (COUT,). Returns NCHW (N, COUT, H, WOUT).
       bdw/bpw cancel exactly through training-mode BatchNorm and are therefore unused."""
    del bdw, bpw
    x = x_nchw.astype(jnp.float32)
    # Layout plumbing: flatten spatial with w as the slow factor -> lane index q = w*H + h.
    # TODO(synk): keep activations in this lane-dense layout across the surrounding graph to
    # eliminate the in/out transposes (each ~8 KiB, comparable in cost to the kernel itself).
    x_s = jnp.transpose(x, (0, 1, 3, 2)).reshape(NC, W * H)                 # (8, 256)

    # Pack all small parameters into ONE slab -> a single DMA, one padded VMEM tile.
    wdw_ck = wdw_t[:, 0, 0, :].astype(jnp.float32)                          # (CIN, KW)
    wpw = wpw_t[:, :, 0, 0].astype(jnp.float32)                             # (COUT, CIN)
    params = jnp.zeros((NO, PCOLS), jnp.float32)
    params = params.at[:, 0:PW_COLS].set(jnp.kron(jnp.eye(N, dtype=jnp.float32), wpw))
    params = params.at[0:NC, DW_COL:DW_COL + KW].set(jnp.tile(wdw_ck, (N, 1)))
    params = params.at[0:COUT, GAMMA_COL].set(gamma.astype(jnp.float32))
    params = params.at[0:COUT, BETA_COL].set(beta.astype(jnp.float32))

    # Gridless single invocation: whole (tiny) arrays live in VMEM, two input DMAs total.
    y = pl.pallas_call(
        fused_sepconv_bn_relu_kernel,
        out_shape=jax.ShapeDtypeStruct((NO, HWOUT), jnp.float32),
    )(x_s, params)

    # (N*COUT, WOUT*H) -> (N, COUT, WOUT, H) -> NCHW (N, COUT, H, WOUT)
    return jnp.transpose(y.reshape(N, COUT, WOUT, H), (0, 1, 3, 2))


def reference(x, wdw_t, bdw, wpw_t, bpw, gamma, beta):
    # Pure-JAX reference mirroring the PyTorch forward (NCHW, training-mode BN, with biases).
    dw = jnp.zeros((N, CIN, H, WOUT), jnp.float32)
    for k in range(KW):
        dw = dw + x[:, :, :, k:k + WOUT] * wdw_t[:, 0, 0, k][None, :, None, None]
    dw = dw + bdw[None, :, None, None]
    pw = jnp.einsum('nchw,oc->nohw', dw, wpw_t[:, :, 0, 0]) + bpw[None, :, None, None]
    mean = pw.mean(axis=(0, 2, 3), keepdims=True)
    var = ((pw - mean) ** 2).mean(axis=(0, 2, 3), keepdims=True)   # biased, as in BN training
    y = (pw - mean) / jnp.sqrt(var + EPS) * gamma[None, :, None, None] + beta[None, :, None, None]
    return jnp.maximum(y, 0.0)


if __name__ == "__main__":
    key = jax.random.PRNGKey(0)
    kx, k1, k2, k3, k4, k5, k6 = jax.random.split(key, 7)
    x = jax.random.normal(kx, (N, CIN, H, W), jnp.float32)
    wdw_t = 0.2 * jax.random.normal(k1, (CIN, 1, KH, KW), jnp.float32)   # depthwise weight
    bdw = 0.1 * jax.random.normal(k2, (CIN,), jnp.float32)               # depthwise bias
    wpw_t = 0.2 * jax.random.normal(k3, (COUT, CIN, 1, 1), jnp.float32)  # pointwise weight
    bpw = 0.1 * jax.random.normal(k4, (COUT,), jnp.float32)              # pointwise bias
    gamma = 1.0 + 0.1 * jax.random.normal(k5, (COUT,), jnp.float32)      # BN weight
    beta = 0.1 * jax.random.normal(k6, (COUT,), jnp.float32)             # BN bias

    out = separable_conv2d(x, wdw_t, bdw, wpw_t, bpw, gamma, beta)
    out = jax.block_until_ready(out)

    ref = reference(x, wdw_t, bdw, wpw_t, bpw, gamma, beta)
    assert out.shape == (N, COUT, H, WOUT), out.shape
    assert jnp.allclose(out, ref, rtol=1e-3, atol=1e-3), float(jnp.max(jnp.abs(out - ref)))
    print("KERNEL_OK")
</pallas_src>

<mosaic_0001>
module attributes {stable_mosaic.version = 11 : i64} {
  func.func @fused_sepconv_bn_relu_kernel(%arg0: memref<8x256xf32, #tpu.memory_space<vmem>>, %arg1: memref<16x19xf32, #tpu.memory_space<vmem>>, %arg2: memref<16x128xf32, #tpu.memory_space<vmem>>) attributes {dimension_semantics = [], scalar_prefetch = 0 : i64, scratch_operands = 0 : i64, tpu.core_type = #tpu.core_type<tc>} {
    %c0 = arith.constant 0 : index
    %c0_0 = arith.constant 0 : index
    %0 = vector.load %arg0[%c0, %c0_0] : memref<8x256xf32, #tpu.memory_space<vmem>>, vector<8x256xf32>
    %c0_1 = arith.constant 0 : index
    %c8 = arith.constant 8 : index
    %1 = vector.load %arg1[%c0_1, %c8] : memref<16x19xf32, #tpu.memory_space<vmem>>, vector<8x9xf32>
    %2 = vector.extract_strided_slice %0 {offsets = [0, 0], sizes = [8, 128], strides = [1, 1]} : vector<8x256xf32> to vector<8x128xf32>
    %3 = vector.extract_strided_slice %1 {offsets = [0, 0], sizes = [8, 1], strides = [1, 1]} : vector<8x9xf32> to vector<8x1xf32>
    %4 = vector.broadcast %3 : vector<8x1xf32> to vector<8x128xf32>
    %5 = arith.mulf %2, %4 : vector<8x128xf32>
    %6 = vector.extract_strided_slice %0 {offsets = [0, 16], sizes = [8, 128], strides = [1, 1]} : vector<8x256xf32> to vector<8x128xf32>
    %7 = vector.extract_strided_slice %1 {offsets = [0, 1], sizes = [8, 1], strides = [1, 1]} : vector<8x9xf32> to vector<8x1xf32>
    %8 = vector.broadcast %7 : vector<8x1xf32> to vector<8x128xf32>
    %9 = arith.mulf %6, %8 : vector<8x128xf32>
    %10 = arith.addf %5, %9 : vector<8x128xf32>
    %11 = vector.extract_strided_slice %0 {offsets = [0, 32], sizes = [8, 128], strides = [1, 1]} : vector<8x256xf32> to vector<8x128xf32>
    %12 = vector.extract_strided_slice %1 {offsets = [0, 2], sizes = [8, 1], strides = [1, 1]} : vector<8x9xf32> to vector<8x1xf32>
    %13 = vector.broadcast %12 : vector<8x1xf32> to vector<8x128xf32>
    %14 = arith.mulf %11, %13 : vector<8x128xf32>
    %15 = arith.addf %10, %14 : vector<8x128xf32>
    %16 = vector.extract_strided_slice %0 {offsets = [0, 48], sizes = [8, 128], strides = [1, 1]} : vector<8x256xf32> to vector<8x128xf32>
    %17 = vector.extract_strided_slice %1 {offsets = [0, 3], sizes = [8, 1], strides = [1, 1]} : vector<8x9xf32> to vector<8x1xf32>
    %18 = vector.broadcast %17 : vector<8x1xf32> to vector<8x128xf32>
    %19 = arith.mulf %16, %18 : vector<8x128xf32>
    %20 = arith.addf %15, %19 : vector<8x128xf32>
    %21 = vector.extract_strided_slice %0 {offsets = [0, 64], sizes = [8, 128], strides = [1, 1]} : vector<8x256xf32> to vector<8x128xf32>
    %22 = vector.extract_strided_slice %1 {offsets = [0, 4], sizes = [8, 1], strides = [1, 1]} : vector<8x9xf32> to vector<8x1xf32>
    %23 = vector.broadcast %22 : vector<8x1xf32> to vector<8x128xf32>
    %24 = arith.mulf %21, %23 : vector<8x128xf32>
    %25 = arith.addf %20, %24 : vector<8x128xf32>
    %26 = vector.extract_strided_slice %0 {offsets = [0, 80], sizes = [8, 128], strides = [1, 1]} : vector<8x256xf32> to vector<8x128xf32>
    %27 = vector.extract_strided_slice %1 {offsets = [0, 5], sizes = [8, 1], strides = [1, 1]} : vector<8x9xf32> to vector<8x1xf32>
    %28 = vector.broadcast %27 : vector<8x1xf32> to vector<8x128xf32>
    %29 = arith.mulf %26, %28 : vector<8x128xf32>
    %30 = arith.addf %25, %29 : vector<8x128xf32>
    %31 = vector.extract_strided_slice %0 {offsets = [0, 96], sizes = [8, 128], strides = [1, 1]} : vector<8x256xf32> to vector<8x128xf32>
    %32 = vector.extract_strided_slice %1 {offsets = [0, 6], sizes = [8, 1], strides = [1, 1]} : vector<8x9xf32> to vector<8x1xf32>
    %33 = vector.broadcast %32 : vector<8x1xf32> to vector<8x128xf32>
    %34 = arith.mulf %31, %33 : vector<8x128xf32>
    %35 = arith.addf %30, %34 : vector<8x128xf32>
    %36 = vector.extract_strided_slice %0 {offsets = [0, 112], sizes = [8, 128], strides = [1, 1]} : vector<8x256xf32> to vector<8x128xf32>
    %37 = vector.extract_strided_slice %1 {offsets = [0, 7], sizes = [8, 1], strides = [1, 1]} : vector<8x9xf32> to vector<8x1xf32>
    %38 = vector.broadcast %37 : vector<8x1xf32> to vector<8x128xf32>
    %39 = arith.mulf %36, %38 : vector<8x128xf32>
    %40 = arith.addf %35, %39 : vector<8x128xf32>
    %41 = vector.extract_strided_slice %0 {offsets = [0, 128], sizes = [8, 128], strides = [1, 1]} : vector<8x256xf32> to vector<8x128xf32>
    %42 = vector.extract_strided_slice %1 {offsets = [0, 8], sizes = [8, 1], strides = [1, 1]} : vector<8x9xf32> to vector<8x1xf32>
    %43 = vector.broadcast %42 : vector<8x1xf32> to vector<8x128xf32>
    %44 = arith.mulf %41, %43 : vector<8x128xf32>
    %45 = arith.addf %40, %44 : vector<8x128xf32>
    %c0_2 = arith.constant 0 : index
    %c0_3 = arith.constant 0 : index
    %46 = vector.load %arg1[%c0_2, %c0_3] : memref<16x19xf32, #tpu.memory_space<vmem>>, vector<16x8xf32>
    %cst = arith.constant dense<0.000000e+00> : vector<16x128xf32>
    %47 = tpu.matmul %46, %45, %cst {dimension_numbers = #tpu.dot_dimension_numbers<[1], [0], [0], [1], [0, 0, 1, 1], [], []>} : vector<16x8xf32>, vector<8x128xf32>, vector<16x128xf32> -> vector<16x128xf32>
    %cst_4 = arith.constant dense<0.000000e+00> : vector<16xf32>
    %48 = vector.multi_reduction <add>, %47, %cst_4 [1] : vector<16x128xf32> to vector<16xf32>
    %49 = vector.shape_cast %48 : vector<16xf32> to vector<16x1xf32>
    %50 = arith.mulf %47, %47 : vector<16x128xf32>
    %cst_5 = arith.constant dense<0.000000e+00> : vector<16xf32>
    %51 = vector.multi_reduction <add>, %50, %cst_5 [1] : vector<16x128xf32> to vector<16xf32>
    %52 = vector.shape_cast %51 : vector<16xf32> to vector<16x1xf32>
    %53 = vector.extract_strided_slice %49 {offsets = [0, 0], sizes = [8, 1], strides = [1, 1]} : vector<16x1xf32> to vector<8x1xf32>
    %54 = vector.extract_strided_slice %49 {offsets = [8, 0], sizes = [8, 1], strides = [1, 1]} : vector<16x1xf32> to vector<8x1xf32>
    %55 = arith.addf %53, %54 : vector<8x1xf32>
    %56 = vector.extract_strided_slice %52 {offsets = [0, 0], sizes = [8, 1], strides = [1, 1]} : vector<16x1xf32> to vector<8x1xf32>
    %57 = vector.extract_strided_slice %52 {offsets = [8, 0], sizes = [8, 1], strides = [1, 1]} : vector<16x1xf32> to vector<8x1xf32>
    %58 = arith.addf %56, %57 : vector<8x1xf32>
    %cst_6 = arith.constant 3.906250e-03 : f32
    %59 = vector.broadcast %cst_6 : f32 to vector<8x1xf32>
    %60 = arith.mulf %55, %59 : vector<8x1xf32>
    %cst_7 = arith.constant 3.906250e-03 : f32
    %61 = vector.broadcast %cst_7 : f32 to vector<8x1xf32>
    %62 = arith.mulf %58, %61 : vector<8x1xf32>
    %63 = arith.mulf %60, %60 : vector<8x1xf32>
    %64 = arith.subf %62, %63 : vector<8x1xf32>
    %c0_8 = arith.constant 0 : index
    %c17 = arith.constant 17 : index
    %65 = vector.load %arg1[%c0_8, %c17] : memref<16x19xf32, #tpu.memory_space<vmem>>, vector<8x1xf32>
    %c0_9 = arith.constant 0 : index
    %c18 = arith.constant 18 : index
    %66 = vector.load %arg1[%c0_9, %c18] : memref<16x19xf32, #tpu.memory_space<vmem>>, vector<8x1xf32>
    %cst_10 = arith.constant 9.99999974E-6 : f32
    %67 = vector.broadcast %cst_10 : f32 to vector<8x1xf32>
    %68 = arith.addf %64, %67 : vector<8x1xf32>
    %69 = math.rsqrt %68 : vector<8x1xf32>
    %70 = arith.mulf %65, %69 : vector<8x1xf32>
    %71 = arith.mulf %60, %70 : vector<8x1xf32>
    %72 = arith.subf %66, %71 : vector<8x1xf32>
    %73 = tpu.concatenate %70, %70 in 0 : vector<8x1xf32>, vector<8x1xf32> -> vector<16x1xf32>
    %74 = tpu.concatenate %72, %72 in 0 : vector<8x1xf32>, vector<8x1xf32> -> vector<16x1xf32>
    %75 = vector.broadcast %73 : vector<16x1xf32> to vector<16x128xf32>
    %76 = arith.mulf %47, %75 : vector<16x128xf32>
    %77 = vector.broadcast %74 : vector<16x1xf32> to vector<16x128xf32>
    %78 = arith.addf %76, %77 : vector<16x128xf32>
    %cst_11 = arith.constant 0.000000e+00 : f32
    %79 = vector.broadcast %cst_11 : f32 to vector<16x128xf32>
    %80 = arith.maximumf %78, %79 : vector<16x128xf32>
    %c0_12 = arith.constant 0 : index
    %c0_13 = arith.constant 0 : index
    %81 = vector.load %arg2[%c0_12, %c0_13] : memref<16x128xf32, #tpu.memory_space<vmem>>, vector<16x128xf32>
    tpu.vector_store %arg2[%c0_12, %c0_13], %80 {strides = array<i32>} : memref<16x128xf32, #tpu.memory_space<vmem>>, vector<16x128xf32>,
    return
  }
}

</mosaic_0001>

<llo_original>
// kernel: separable_conv2d.1
$region0: #{separable_conv2d.1}
  #allocation0 [shape = 'u32[]', space=smem, size = 0x4, offset = 0x4, fixed_abs, tag = 'smem constant byte address 0x4 - core index']
  #allocation1 [shape = 'u32[72,128]{1,0:T(1,128)}', space=vmem, size = 0x9000, scoped, tag = 'internal scratch']
  %s0 = inlined_call_operand.vmem [shape: f32[8,256], index: 0, kind: input, shape index: {}]
  %s1 = inlined_call_operand.vmem [shape: f32[16,19], index: 1, kind: input, shape index: {}]
  %s2 = inlined_call_operand.vmem [shape: f32[16,128], index: 2, kind: output, shape index: {}]
  %s3 = sld [smem:[#allocation0]]
  $region18: #{separable_conv2d.1} parent=0
    _
  %s5 = ssub.s32 1, %s3
  %s6 = scalar_select 0, %s5, %s3
  // Predicated region
  $region2: #{separable_conv2d.1} parent=0 // pred_check
    _
  $region3: #{separable_conv2d.1} parent=0 // pred_check_branch
    %8 = sbr.rel (0) target = $region5
  $region4: #{separable_conv2d.1} parent=0 // pred_region
    _
  $region5: #{separable_conv2d.1} parent=0 // pred_fallthru
    _
  // Predicated region
  $region6: #{separable_conv2d.1} parent=0 // pred_check
    _
  $region7: #{separable_conv2d.1} parent=0 // pred_check_branch
    %10 = sbr.rel (0) target = $region9
  $region8: #{separable_conv2d.1} parent=0 // pred_region
    _
  $region9: #{separable_conv2d.1} parent=0 // pred_fallthru
    _
  %v11 = vld [vmem:[%s0] sm:$0xff]
  %v12 = vld [vmem:[%s0 + $0x8] sm:$0xff]
  %v13 = vld [vmem:[%s1] sm:$0xff]
  %15 = vset.pattern.permute.xlu0 8
  %16 = vperm.xlu0 %15, %v13
  %v17 = vpop.permute.xlu0 %16
  %v19 = vmul.f32 %v11, %v17
  %20 = vset.pattern.permute.xlu0 9
  %21 = vperm.xlu0 %20, %v13
  %v22 = vpop.permute.xlu0 %21
  %v24 = vmul.f32 %v11, %v22
  %v25 = vmul.f32 %v12, %v22
  %28 = vrot.lane.b32.xlu0 %v24, 112
  %v29 = vpop.permute.xlu0 %28
  %30 = vrot.lane.b32.xlu0 %v25, 112
  %v31 = vpop.permute.xlu0 %30
  %vm32 = vcmask 916480
  %v33 = vsel %vm32, %v29, %v31
  %v35 = vadd.f32 %v19, %v33
  %36 = vset.pattern.permute.xlu0 10
  %37 = vperm.xlu0 %36, %v13
  %v38 = vpop.permute.xlu0 %37
  %v40 = vmul.f32 %v11, %v38
  %v41 = vmul.f32 %v12, %v38
  %44 = vrot.lane.b32.xlu0 %v40, 96
  %v45 = vpop.permute.xlu0 %44
  %46 = vrot.lane.b32.xlu0 %v41, 96
  %v47 = vpop.permute.xlu0 %46
  %vm48 = vcmask 785408
  %v49 = vsel %vm48, %v45, %v47
  %v51 = vadd.f32 %v35, %v49
  %52 = vset.pattern.permute.xlu0 11
  %53 = vperm.xlu0 %52, %v13
  %v54 = vpop.permute.xlu0 %53
  %v56 = vmul.f32 %v11, %v54
  %v57 = vmul.f32 %v12, %v54
  %60 = vrot.lane.b32.xlu0 %v56, 80
  %v61 = vpop.permute.xlu0 %60
  %62 = vrot.lane.b32.xlu0 %v57, 80
  %v63 = vpop.permute.xlu0 %62
  %vm64 = vcmask 654336
  %v65 = vsel %vm64, %v61, %v63
  %v67 = vadd.f32 %v51, %v65
  %68 = vset.pattern.permute.xlu0 12
  %69 = vperm.xlu0 %68, %v13
  %v70 = vpop.permute.xlu0 %69
  %v72 = vmul.f32 %v11, %v70
  %v73 = vmul.f32 %v12, %v70
  %76 = vrot.lane.b32.xlu0 %v72, 64
  %v77 = vpop.permute.xlu0 %76
  %78 = vrot.lane.b32.xlu0 %v73, 64
  %v79 = vpop.permute.xlu0 %78
  %vm80 = vcmask 523264
  %v81 = vsel %vm80, %v77, %v79
  %v83 = vadd.f32 %v67, %v81
  %84 = vset.pattern.permute.xlu0 13
  %85 = vperm.xlu0 %84, %v13
  %v86 = vpop.permute.xlu0 %85
  %v88 = vmul.f32 %v11, %v86
  %v89 = vmul.f32 %v12, %v86
  %92 = vrot.lane.b32.xlu0 %v88, 48
  %v93 = vpop.permute.xlu0 %92
  %94 = vrot.lane.b32.xlu0 %v89, 48
  %v95 = vpop.permute.xlu0 %94
  %vm96 = vcmask 392192
  %v97 = vsel %vm96, %v93, %v95
  %v99 = vadd.f32 %v83, %v97
  %100 = vset.pattern.permute.xlu0 14
  %101 = vperm.xlu0 %100, %v13
  %v102 = vpop.permute.xlu0 %101
  %v104 = vmul.f32 %v11, %v102
  %v105 = vmul.f32 %v12, %v102
  %108 = vrot.lane.b32.xlu0 %v104, 32
  %v109 = vpop.permute.xlu0 %108
  %110 = vrot.lane.b32.xlu0 %v105, 32
  %v111 = vpop.permute.xlu0 %110
  %vm112 = vcmask 261120
  %v113 = vsel %vm112, %v109, %v111
  %v115 = vadd.f32 %v99, %v113
  %116 = vset.pattern.permute.xlu0 15
  %117 = vperm.xlu0 %116, %v13
  %v118 = vpop.permute.xlu0 %117
  %v120 = vmul.f32 %v11, %v118
  %v121 = vmul.f32 %v12, %v118
  %124 = vrot.lane.b32.xlu0 %v120, 16
  %v125 = vpop.permute.xlu0 %124
  %126 = vrot.lane.b32.xlu0 %v121, 16
  %v127 = vpop.permute.xlu0 %126
  %vm128 = vcmask 130048
  %v129 = vsel %vm128, %v125, %v127
  %v131 = vadd.f32 %v115, %v129
  %132 = vset.pattern.permute.xlu0 16
  %133 = vperm.xlu0 %132, %v13
  %v134 = vpop.permute.xlu0 %133
  %v136 = vmul.f32 %v12, %v134
  %v137 = vadd.f32 %v131, %v136
  %v138 = vld [vmem:[%s1] sm:$0xff]
  %v139 = vld [vmem:[%s1 + $0x8] sm:$0xff]
  %vm140 = vcmask 64512
  %v142 = vsel %vm140, %v138, 0
  %v145 = vsel %vm140, %v139, 0
  %147 = vmatpush.msra.mxu0 0.0
  %148 = vmatpush.msra.mxu0 0.0
  %149 = vmatpush.msra.mxu0 0.0
  %150 = vmatpush.msra.mxu0 0.0
  %151 = vmatpush.msra.mxu0 0.0
  %152 = vmatpush.msra.mxu0 0.0
  %153 = vmatpush.msra.mxu0 0.0
  %154 = vmatpush.msra.mxu0 0.0
  %155 = vmatpush.msra.mxu0 0.0
  %156 = vmatpush.msra.mxu0 0.0
  %157 = vmatpush.msra.mxu0 0.0
  %158 = vmatpush.msra.mxu0 0.0
  %159 = vmatpush.msra.mxu0 0.0
  %160 = vmatpush.msra.mxu0 0.0
  %161 = vmatpush.msra.mxu0 0.0
  %162 = vmatpush.msra.mxu0 %v137
  %163 = vmatmul.f32.gmra.mxu0 %v142
  %v164 = vpop.f32.mrf.mxu0
  %v165 = vadd.f32 0.0, %v164
  %166 = vmatmul.f32.gmra.mxu0 %v145
  %v167 = vpop.f32.mrf.mxu0
  %v168 = vadd.f32 0.0, %v167
  %169 = vdwg.mxu0
  %170 = vadd.xlane.f32.xlu0 %v165
  %v171 = vpop.xlane.xlu0 %170
  %172 = vadd.xlane.f32.xlu0 %v168
  %v173 = vpop.xlane.xlu0 %172
  %v174 = vmul.f32 %v165, %v165
  %v175 = vmul.f32 %v168, %v168
  %176 = vadd.xlane.f32.xlu0 %v174
  %v177 = vpop.xlane.xlu0 %176
  %178 = vadd.xlane.f32.xlu0 %v175
  %v179 = vpop.xlane.xlu0 %178
  %v180 = vadd.f32 %v171, %v173
  %v181 = vadd.f32 %v177, %v179
  %v182 = vmul.f32 %v180, 0.00390625
  %v183 = vmul.f32 %v181, 0.00390625
  %v184 = vmul.f32 %v182, %v182
  %v185 = vsub.f32 %v183, %v184
  %v186 = vadd.f32 %v185, 1e-05
  %v187 = vrsqrt.pop %v186
  %v188 = vmul.f32 %v187, %v186
  %v189 = vmul.f32 %v188, %v187
  %v190 = vmul.f32 0.5, %v189
  %v191 = vsub.f32 1.5, %v190
  %v192 = vmul.f32 %v187, %v191
  %vm193 = vweird.f32 %v186
  %vm194 = vweird.f32 %v187
  %vm195 = vmor %vm193, %vm194
  %v196 = vsel %vm195, %v187, %v192
  %v197 = vmul.f32 %v13, %v196
  %v198 = vmul.f32 %v182, %v197
  %200 = vrot.lane.b32.xlu0 %v198, 1
  %v201 = vpop.permute.xlu0 %200
  %v203 = vsub.f32 %v13, %v201
  %205 = vset.pattern.permute.xlu0 17
  %206 = vperm.xlu0 %205, %v197
  %v207 = vpop.permute.xlu0 %206
  %v209 = vmul.f32 %v165, %v207
  %v210 = vmul.f32 %v168, %v207
  %212 = vset.pattern.permute.xlu0 18
  %213 = vperm.xlu0 %212, %v203
  %v214 = vpop.permute.xlu0 %213
  %v216 = vadd.f32 %v209, %v214
  %v217 = vadd.f32 %v210, %v214
  %v218 = vmax.f32 %v216, 0.0
  %v219 = vmax.f32 %v217, 0.0
  %220 = vst [vmem:[%s2] sm:$0xff] %v218
  %221 = vst [vmem:[%s2 + $0x8] sm:$0xff] %v219
  // Predicated region
  $region10: #{separable_conv2d.1} parent=0 // pred_check
    _
  $region11: #{separable_conv2d.1} parent=0 // pred_check_branch
    %223 = sbr.rel (0) target = $region13
  $region12: #{separable_conv2d.1} parent=0 // pred_region
    _
  $region13: #{separable_conv2d.1} parent=0 // pred_fallthru
    _
  // Predicated region
  $region14: #{separable_conv2d.1} parent=0 // pred_check
    _
  $region15: #{separable_conv2d.1} parent=0 // pred_check_branch
    %225 = sbr.rel (0) target = $region17
  $region16: #{separable_conv2d.1} parent=0 // pred_region
    _
  $region17: #{separable_conv2d.1} parent=0 // pred_fallthru
    _

</llo_original>
